<compile_context>
chip_gen: v7x
topology: tpu7x:2x2x1
jax: 0.10.0
libtpu: 0.0.40
codegen_flags: <defaults>
</compile_context>

<pallas_src>
import jax
import jax.numpy as jnp
from jax.experimental import pallas as pl
from jax.experimental.pallas import tpu as pltpu


def glu_kernel(x_ref, w_ref, b_ref, o_ref):
    # One fused MXU pass: (tm, K) @ (K, 2N) -> (tm, 2N), f32 accumulation.
    y = jnp.dot(x_ref[...], w_ref[...], preferred_element_type=jnp.float32)
    y = y + b_ref[...]                       # bias add in f32 (VPU)
    n = o_ref.shape[-1]
    gate_logits = y[:, :n]
    msg = y[:, n:]
    # sigmoid(z) = 1 / (1 + exp(-z)); exp on EUP, approx reciprocal keeps the
    # divide off the critical path.
    gate = pl.reciprocal(1.0 + jnp.exp(-gate_logits), approx=True)
    o_ref[...] = (gate * msg).astype(o_ref.dtype)


def _round_up(x, m):
    return (x + m - 1) // m * m


def fuse_glu_params(wg, bg, wm, bm):
    """Pre-fuse the two Linear layers once at init time.

    wg/wm: (input_length, hidden_dim)  (nn.Linear weight, transposed)
    bg/bm: (hidden_dim,) or (1, hidden_dim)
    Returns (w_fused (K, 2N) f32, b_fused (1, 2N) f32).
    """
    K, N = wg.shape
    assert wm.shape == (K, N), "gate/message weight shapes must match"
    bg = jnp.asarray(bg, dtype=jnp.float32).reshape(1, N)
    bm = jnp.asarray(bm, dtype=jnp.float32).reshape(1, N)
    w_fused = jnp.concatenate([wg, wm], axis=1).astype(jnp.float32)   # (K, 2N)
    b_fused = jnp.concatenate([bg, bm], axis=1)                       # (1, 2N)
    return w_fused, b_fused


def glu_forward(x, w_fused, b_fused, *, tile_m=2048, out_dtype=None):
    """x: (..., input_length). w_fused: (K, 2N). b_fused: (1, 2N).

    Returns (..., hidden_dim) in out_dtype (default: x.dtype).
    """
    orig_shape = x.shape
    K = orig_shape[-1]
    K2, N2 = w_fused.shape
    assert K == K2 and N2 % 2 == 0
    N = N2 // 2
    out_dtype = x.dtype if out_dtype is None else out_dtype

    x2 = x.reshape(-1, K)                    # free contiguous reshape
    M = x2.shape[0]

    # Row tile: as large as useful, multiple of 8, no pad / no forced split.
    tm = min(_round_up(tile_m, 8), _round_up(M, 8))
    grid = (pl.cdiv(M, tm),)                 # ragged last block handled by Pallas

    out = pl.pallas_call(
        glu_kernel,
        out_shape=jax.ShapeDtypeStruct((M, N), out_dtype),
        grid_spec=pl.GridSpec(
            grid=grid,
            in_specs=[
                pl.BlockSpec((tm, K), lambda i: (i, 0)),        # x row-tile (f32)
                pl.BlockSpec((K, 2 * N), lambda i: (0, 0)),     # fused Wg|Wm (resident)
                pl.BlockSpec((1, 2 * N), lambda i: (0, 0)),     # fused bg|bm (f32)
            ],
            out_specs=pl.BlockSpec((tm, N), lambda i: (i, 0)),
        ),
        compiler_params=pltpu.CompilerParams(
            dimension_semantics=("parallel",),
        ),
    )(x2, w_fused, b_fused)

    return out.reshape(*orig_shape[:-1], N)


def glu_reference(x, wg, bg, wm, bm):
    gate = jax.nn.sigmoid(x @ wg + bg)
    message = x @ wm + bm
    return gate * message


if __name__ == "__main__":
    input_length = 32   # in_features of both Linear layers
    hidden_dim = 64     # out_features of both Linear layers
    batch = 16          # number of rows fed through the GLU

    key = jax.random.PRNGKey(0)
    kx, kwg, kbg, kwm, kbm = jax.random.split(key, 5)

    x = jax.random.normal(kx, (batch, input_length), dtype=jnp.float32)
    # nn.Linear weight is (out, in); stored here transposed as (in, out).
    wg = jax.random.normal(kwg, (input_length, hidden_dim), dtype=jnp.float32) * 0.1
    bg = jax.random.normal(kbg, (hidden_dim,), dtype=jnp.float32) * 0.1
    wm = jax.random.normal(kwm, (input_length, hidden_dim), dtype=jnp.float32) * 0.1
    bm = jax.random.normal(kbm, (hidden_dim,), dtype=jnp.float32) * 0.1

    # Fuse once (init-time), reuse across calls.
    w_fused, b_fused = fuse_glu_params(wg, bg, wm, bm)

    out = glu_forward(x, w_fused, b_fused)
    out = jax.block_until_ready(out)

    ref = glu_reference(x, wg, bg, wm, bm)
    assert out.shape == (batch, hidden_dim)
    # f32 matmul; only deviation is the approx EUP reciprocal in the sigmoid.
    assert jnp.allclose(out, ref, atol=1e-2, rtol=1e-2), "mismatch vs reference"

    print("KERNEL_OK")
</pallas_src>

<mosaic_0001>
module attributes {stable_mosaic.version = 11 : i64} {
  func.func @glu_kernel(%arg0: i32, %arg1: memref<16x32xf32, #tpu.memory_space<vmem>>, %arg2: memref<32x128xf32, #tpu.memory_space<vmem>>, %arg3: memref<1x128xf32, #tpu.memory_space<vmem>>, %arg4: memref<16x64xf32, #tpu.memory_space<vmem>>) attributes {dimension_semantics = [#tpu.dimension_semantics<parallel>], iteration_bounds = array<i64: 1>, scalar_prefetch = 0 : i64, scratch_operands = 0 : i64, tpu.core_type = #tpu.core_type<tc>, window_params = [{transform_indices = @transform_0, window_bounds = array<i64: 16, 32>}, {pipeline_mode = #tpu.pipeline_mode<synchronous>, transform_indices = @transform_1, window_bounds = array<i64: 32, 128>}, {pipeline_mode = #tpu.pipeline_mode<synchronous>, transform_indices = @transform_2, window_bounds = array<i64: 1, 128>}, {transform_indices = @transform_3, window_bounds = array<i64: 16, 64>}]} {
    %c0 = arith.constant 0 : index
    %c0_0 = arith.constant 0 : index
    %0 = vector.load %arg1[%c0, %c0_0] : memref<16x32xf32, #tpu.memory_space<vmem>>, vector<16x32xf32>
    %c0_1 = arith.constant 0 : index
    %c0_2 = arith.constant 0 : index
    %1 = vector.load %arg2[%c0_1, %c0_2] : memref<32x128xf32, #tpu.memory_space<vmem>>, vector<32x128xf32>
    %cst = arith.constant dense<0.000000e+00> : vector<16x128xf32>
    %2 = tpu.matmul %0, %1, %cst {dimension_numbers = #tpu.dot_dimension_numbers<[1], [0], [0], [1], [0, 0, 1, 1], [], []>} : vector<16x32xf32>, vector<32x128xf32>, vector<16x128xf32> -> vector<16x128xf32>
    %c0_3 = arith.constant 0 : index
    %c0_4 = arith.constant 0 : index
    %3 = vector.load %arg3[%c0_3, %c0_4] : memref<1x128xf32, #tpu.memory_space<vmem>>, vector<1x128xf32>
    %4 = vector.broadcast %3 : vector<1x128xf32> to vector<16x128xf32>
    %5 = arith.addf %2, %4 : vector<16x128xf32>
    %6 = vector.extract_strided_slice %5 {offsets = [0, 0], sizes = [16, 64], strides = [1, 1]} : vector<16x128xf32> to vector<16x64xf32>
    %7 = vector.extract_strided_slice %5 {offsets = [0, 64], sizes = [16, 64], strides = [1, 1]} : vector<16x128xf32> to vector<16x64xf32>
    %cst_5 = arith.constant 0.000000e+00 : f32
    %8 = vector.broadcast %cst_5 : f32 to vector<16x64xf32>
    %9 = arith.subf %8, %6 : vector<16x64xf32>
    %10 = math.exp %9 : vector<16x64xf32>
    %cst_6 = arith.constant 1.000000e+00 : f32
    %11 = vector.broadcast %cst_6 : f32 to vector<16x64xf32>
    %12 = arith.addf %11, %10 : vector<16x64xf32>
    %13 = tpu.reciprocal %12 {approx = true} : vector<16x64xf32> -> vector<16x64xf32>
    %14 = arith.mulf %13, %7 : vector<16x64xf32>
    %c0_7 = arith.constant 0 : index
    %c0_8 = arith.constant 0 : index
    %15 = vector.load %arg4[%c0_7, %c0_8] : memref<16x64xf32, #tpu.memory_space<vmem>>, vector<16x64xf32>
    tpu.vector_store %arg4[%c0_7, %c0_8], %14 {strides = array<i32>} : memref<16x64xf32, #tpu.memory_space<vmem>>, vector<16x64xf32>,
    return
  }
  func.func @transform_0(%arg0: i32) -> (i32, i32) {
    %c0_i32 = arith.constant 0 : i32
    %c0_i32_0 = arith.constant 0 : i32
    return %arg0, %c0_i32 : i32, i32
  }
  func.func @transform_1(%arg0: i32) -> (i32, i32) {
    %c0_i32 = arith.constant 0 : i32
    %c0_i32_0 = arith.constant 0 : i32
    %c0_i32_1 = arith.constant 0 : i32
    return %c0_i32, %c0_i32_0 : i32, i32
  }
  func.func @transform_2(%arg0: i32) -> (i32, i32) {
    %c0_i32 = arith.constant 0 : i32
    %c0_i32_0 = arith.constant 0 : i32
    %c0_i32_1 = arith.constant 0 : i32
    return %c0_i32, %c0_i32_0 : i32, i32
  }
  func.func @transform_3(%arg0: i32) -> (i32, i32) {
    %c0_i32 = arith.constant 0 : i32
    %c0_i32_0 = arith.constant 0 : i32
    return %arg0, %c0_i32 : i32, i32
  }
}

</mosaic_0001>

<llo_original>
// kernel: tpu_custom_call.1
$region0: #{tpu_custom_call.1}
  #allocation0 [shape = 'u32[]', space=smem, size = 0x4, offset = 0x4, fixed_abs, tag = 'smem constant byte address 0x4 - core index']
  #allocation1 [shape = 'u32[144,128]{1,0:T(1,128)}', space=vmem, size = 0x12000, scoped, tag = 'internal scratch']
  %s0 = inlined_call_operand.hbm [shape: f32[16,32], index: 0, kind: input, shape index: {}]
  %s1 = inlined_call_operand.hbm [shape: f32[32,128], index: 1, kind: input, shape index: {}]
  %s2 = inlined_call_operand.vmem [shape: f32[1,128], index: 2, kind: input, shape index: {}]
  %s3 = inlined_call_operand.hbm [shape: f32[16,64], index: 3, kind: output, shape index: {}]
  %s4 = sld [smem:[#allocation0]]
  $region30: #{tpu_custom_call.1} parent=0
    _
  %s6 = ssub.s32 1, %s4
  %s7 = scalar_select 0, %s6, %s4
  $region1: #{tpu_custom_call.1} parent=0
    #allocation2 [shape = 'u8[8192]{0}', space=vmem, size = 0x2000, scoped, tag = 'input window, operand 0, single buffered']
    #allocation3 [shape = 's32[1]{0}', space=sflag, size = 0x4, scoped, tag = 'scoped memory for tpu_custom_call.1']
    #allocation4 [shape = 's32[1]{0}', space=sflag, size = 0x4, scoped, tag = 'scoped memory for tpu_custom_call.1']
    #allocation5 [shape = 'u8[16384]{0}', space=vmem, size = 0x4000, scoped, tag = 'input window, operand 1, single buffered']
    #allocation6 [shape = 's32[1]{0}', space=sflag, size = 0x4, scoped, tag = 'scoped memory for tpu_custom_call.1']
    #allocation7 [shape = 'u8[8192]{0}', space=vmem, size = 0x2000, scoped, tag = 'output window, operand 0, single buffered']
    %8 = vsyncpa [#allocation3], 0
    %9 = vsyncpa [#allocation6], 0
    %10 = vsyncpa [#allocation4], 0
    // Predicated region
    $region2: #{tpu_custom_call.1} parent=1 // pred_check
      _
    $region3: #{tpu_custom_call.1} parent=1 // pred_check_branch
      %12 = sbr.rel (0) target = $region5
    $region4: #{tpu_custom_call.1} parent=1 // pred_region
      %s14 = ssub.s32 256, 256
      %15 = vsyncadd [#allocation3], %s14
      %s16 = sshll.u32 [#allocation2], 4
      %s17 = int_to_ptr.vmem [resolvable:$true] %s16
      %22 = dma.hbm_to_vmem [thread:$0]  %s0, 256, %s17, [#allocation3], 128, 128, 8
    $region5: #{tpu_custom_call.1} parent=1 // pred_fallthru
      _
    // Predicated region
    $region6: #{tpu_custom_call.1} parent=1 // pred_check
      _
    $region7: #{tpu_custom_call.1} parent=1 // pred_check_branch
      %24 = sbr.rel (0) target = $region9
    $region8: #{tpu_custom_call.1} parent=1 // pred_region
      %s26 = ssub.s32 512, 512
      %27 = vsyncadd [#allocation6], %s26
      %s28 = sshll.u32 [#allocation5], 4
      %s29 = int_to_ptr.vmem [resolvable:$true] %s28
      %34 = dma.hbm_to_vmem [thread:$0]  %s1, 512, %s29, [#allocation6], 128, 128, 8
    $region9: #{tpu_custom_call.1} parent=1 // pred_fallthru
      _
    // Predicated region
    $region10: #{tpu_custom_call.1} parent=1 // pred_check
      _
    $region11: #{tpu_custom_call.1} parent=1 // pred_check_branch
      %36 = sbr.rel (0) target = $region13
    $region12: #{tpu_custom_call.1} parent=1 // pred_region
      _
    $region13: #{tpu_custom_call.1} parent=1 // pred_fallthru
      _
    // Predicated region
    $region14: #{tpu_custom_call.1} parent=1 // pred_check
      _
    $region15: #{tpu_custom_call.1} parent=1 // pred_check_branch
      %38 = sbr.rel (0) target = $region17
    $region16: #{tpu_custom_call.1} parent=1 // pred_region
      %39 = dma.done [#allocation3], 256
    $region17: #{tpu_custom_call.1} parent=1 // pred_fallthru
      _
    // Predicated region
    $region18: #{tpu_custom_call.1} parent=1 // pred_check
      _
    $region19: #{tpu_custom_call.1} parent=1 // pred_check_branch
      %41 = sbr.rel (0) target = $region21
    $region20: #{tpu_custom_call.1} parent=1 // pred_region
      %42 = dma.done [#allocation6], 512
    $region21: #{tpu_custom_call.1} parent=1 // pred_fallthru
      _
    %v43 = vld [vmem:[#allocation2] sm:$0xff]
    %v44 = vld [vmem:[#allocation2 + $0x8] sm:$0xff]
    %v45 = vld [vmem:[#allocation5] sm:$0xff]
    %v46 = vld [vmem:[#allocation5 + $0x8] sm:$0xff]
    %v47 = vld [vmem:[#allocation5 + $0x10] sm:$0xff]
    %v48 = vld [vmem:[#allocation5 + $0x18] sm:$0xff]
    %v49 = vld [vmem:[%s2] sm:$0x1]
    %v51 = vlaneseq
    %v52 = vshrl.u32 %v51, 7
    %v53 = vsub.s32 0, %v52
    %v54 = vrot.slane %v49, %v53
    %vm56 = vcmask 261120
    %v58 = vsel %vm56, %v43, 0
    %v61 = vsel %vm56, %v44, 0
    %63 = vmatprep.subr.mxu0 0.0
    %64 = vmatpush1.msra.mxu0 %v45
    %65 = vmatprep.subr.mxu0 0.0
    %66 = vmatpush1.msra.mxu0 %v46
    %67 = vmatprep.subr.mxu0 0.0
    %68 = vmatpush1.msra.mxu0 %v47
    %69 = vmatprep.subr.mxu0 0.0
    %70 = vmatpush1.msra.mxu0 %v48
    %71 = vmatprep.subr.mxu0 0.0
    %72 = vmatpush1.msra.mxu0 0.0
    %73 = vmatprep.subr.mxu0 0.0
    %74 = vmatpush1.msra.mxu0 0.0
    %75 = vmatprep.subr.mxu0 0.0
    %76 = vmatpush1.msra.mxu0 0.0
    %77 = vmatprep.subr.mxu0 0.0
    %78 = vmatpush1.msra.mxu0 0.0
    %79 = vmatprep.subr.mxu0 0.0
    %80 = vmatpush1.msra.mxu0 0.0
    %81 = vmatprep.subr.mxu0 0.0
    %82 = vmatpush1.msra.mxu0 0.0
    %83 = vmatprep.subr.mxu0 0.0
    %84 = vmatpush1.msra.mxu0 0.0
    %85 = vmatprep.subr.mxu0 0.0
    %86 = vmatpush1.msra.mxu0 0.0
    %87 = vmatprep.subr.mxu0 0.0
    %88 = vmatpush1.msra.mxu0 0.0
    %89 = vmatprep.subr.mxu0 0.0
    %90 = vmatpush1.msra.mxu0 0.0
    %91 = vmatprep.subr.mxu0 0.0
    %92 = vmatpush1.msra.mxu0 0.0
    %93 = vmatprep.subr.mxu0 0.0
    %94 = vmatpush1.msra.mxu0 0.0
    %95 = vmatprep.subr.mxu0 0.0
    %96 = vmatpush1.msra.mxu0 0.0
    %97 = vmatprep.subr.mxu0 0.0
    %98 = vmatpush1.msra.mxu0 0.0
    %99 = vmatprep.subr.mxu0 0.0
    %100 = vmatpush1.msra.mxu0 0.0
    %101 = vmatprep.subr.mxu0 0.0
    %102 = vmatpush1.msra.mxu0 0.0
    %103 = vmatprep.subr.mxu0 0.0
    %104 = vmatpush1.msra.mxu0 0.0
    %105 = vmatprep.subr.mxu0 0.0
    %106 = vmatpush1.msra.mxu0 0.0
    %107 = vmatprep.subr.mxu0 0.0
    %108 = vmatpush1.msra.mxu0 0.0
    %109 = vmatprep.subr.mxu0 0.0
    %110 = vmatpush1.msra.mxu0 0.0
    %111 = vmatprep.subr.mxu0 0.0
    %112 = vmatpush1.msra.mxu0 0.0
    %113 = vmatprep.subr.mxu0 0.0
    %114 = vmatpush1.msra.mxu0 0.0
    %115 = vmatprep.subr.mxu0 0.0
    %116 = vmatpush1.msra.mxu0 0.0
    %117 = vmatprep.subr.mxu0 0.0
    %118 = vmatpush1.msra.mxu0 0.0
    %119 = vmatprep.subr.mxu0 0.0
    %120 = vmatpush1.msra.mxu0 0.0
    %121 = vmatprep.subr.mxu0 0.0
    %122 = vmatpush1.msra.mxu0 0.0
    %123 = vmatprep.subr.mxu0 0.0
    %124 = vmatpush1.msra.mxu0 0.0
    %125 = vmatprep.subr.mxu0 0.0
    %126 = vmatpush1.msra.mxu0 0.0
    %127 = vmatprep.mubr.f32.mxu0 0.0
    %128 = vmatmul.mubr.f32.gmra.mrb[0].mxu0 %v58
    %v129 = vpop.f32.mrb[0].mxu0
    %v130 = vadd.f32 %v54, %v129
    %v131 = vpop.f32.mrb[0].mxu0
    %132 = vmatprep.mubr.f32.mxu0 0.0
    %133 = vmatmul.mubr.f32.gmra.mrb[0].mxu0 %v61
    %v134 = vpop.f32.mrb[0].mxu0
    %v135 = vadd.f32 %v54, %v134
    %v136 = vpop.f32.mrb[0].mxu0
    %137 = vdwg.mxu0
    %v138 = vsub.f32 0.0, %v130
    %v139 = vsub.f32 0.0, %v135
    %v140 = vmul.f32 %v138, 1.442695
    %v141 = vpow.pop %v140
    %v142 = vmul.f32 %v139, 1.442695
    %v143 = vpow.pop %v142
    %v144 = vadd.f32 %v141, 1.0
    %v145 = vadd.f32 %v143, 1.0
    %v146 = vrcp.pop %v144
    %v147 = vrcp.pop %v145
    %150 = vrot.lane.b32.xlu0 %v130, 64
    %v151 = vpop.permute.xlu0 %150
    %152 = vrot.lane.b32.xlu0 %v135, 64
    %v153 = vpop.permute.xlu0 %152
    %v156 = vmul.f32 %v146, %v151
    %v157 = vmul.f32 %v147, %v153
    %vm158 = vcmask 523264
    %159 = vst.msk [vmem:[#allocation7] sm:$0xff] %vm158, %v156
    %160 = vst.msk [vmem:[#allocation7 + $0x8] sm:$0xff] %vm158, %v157
    // Predicated region
    $region22: #{tpu_custom_call.1} parent=1 // pred_check
      _
    $region23: #{tpu_custom_call.1} parent=1 // pred_check_branch
      %162 = sbr.rel (0) target = $region25
    $region24: #{tpu_custom_call.1} parent=1 // pred_region
      %s164 = ssub.s32 256, 256
      %165 = vsyncadd [#allocation4], %s164
      %s166 = sshll.u32 [#allocation7], 4
      %s167 = int_to_ptr.vmem [resolvable:$true] %s166
      %172 = dma.vmem_to_hbm [thread:$0]  %s167, 256, %s3, [#allocation4], 128, 128, 8
    $region25: #{tpu_custom_call.1} parent=1 // pred_fallthru
      _
    // Predicated region
    $region26: #{tpu_custom_call.1} parent=1 // pred_check
      _
    $region27: #{tpu_custom_call.1} parent=1 // pred_check_branch
      %174 = sbr.rel (0) target = $region29
    $region28: #{tpu_custom_call.1} parent=1 // pred_region
      %175 = dma.done [#allocation4], 256
    $region29: #{tpu_custom_call.1} parent=1 // pred_fallthru
      _
    %176 = vsyncpa [#allocation3], 1
    %177 = vsyncpa [#allocation6], 1
    %178 = vsyncpa [#allocation4], 1

</llo_original>
